<compile_context>
chip_gen: v7x
topology: tpu7x:2x2x1
jax: 0.10.0
libtpu: 0.0.40
codegen_flags: <defaults>
</compile_context>

<pallas_src>
import functools

import numpy as np
import jax
import jax.numpy as jnp
from jax import lax
from jax.experimental import pallas as pl
from jax.experimental.pallas import tpu as pltpu

EPS = 1e-6          # torch.nn.PairwiseDistance default eps
NEG_INF = -1e30     # finite large-negative sentinel for masked logsumexp


def _round_up(a, b):
    return ((a + b - 1) // b) * b


def _lifted_kernel(x_i_ref, x_j_ref, lab_i_ref, lab_j_ref,
                   rsq_i_ref, rsum_i_ref, rsq_j_ref, rsum_j_ref,
                   loss_ref, valid_ref, norm_ref,
                   m_pos, l_pos, m_neg, l_neg,
                   *, margin, num_rows):
    i = pl.program_id(0)
    j = pl.program_id(1)
    nj = pl.num_programs(1)

    blk_i = x_i_ref.shape[0]
    blk_j = x_j_ref.shape[0]
    dim = x_i_ref.shape[1]

    @pl.when(j == 0)
    def _init():
        m_pos[...] = jnp.full_like(m_pos, NEG_INF)
        l_pos[...] = jnp.zeros_like(l_pos)
        m_neg[...] = jnp.full_like(m_neg, NEG_INF)
        l_neg[...] = jnp.zeros_like(l_neg)

    x_i = x_i_ref[...].astype(jnp.float32)          # (blk_i, dim)
    x_j = x_j_ref[...].astype(jnp.float32)          # (blk_j, dim)

    rsq_i = rsq_i_ref[...]                          # (blk_i, 1)
    rsum_i = rsum_i_ref[...]                        # (blk_i, 1)
    rsq_j = rsq_j_ref[...]                          # (1, blk_j)
    rsum_j = rsum_j_ref[...]                        # (1, blk_j)

    # Gram-matrix pairwise distances on the MXU with PyTorch's eps convention.
    gram = lax.dot_general(x_i, x_j,
                           dimension_numbers=(((1,), (1,)), ((), ())),
                           preferred_element_type=jnp.float32)   # (blk_i, blk_j)
    sq = (rsq_i + rsq_j - 2.0 * gram
          + (2.0 * EPS) * (rsum_i - rsum_j) + (dim * EPS * EPS))
    dist = jnp.sqrt(jnp.maximum(sq, 0.0))           # clamp: cancellation on near-dupes

    # Masks rebuilt in-kernel from labels (no BSxBS mask DMA, no host mining).
    same = lab_i_ref[...] == lab_j_ref[...]                              # (blk_i, blk_j)
    row_ids = i * blk_i + lax.broadcasted_iota(jnp.int32, (blk_i, blk_j), 0)
    col_ids = j * blk_j + lax.broadcasted_iota(jnp.int32, (blk_i, blk_j), 1)
    col_ok = col_ids < num_rows
    pos_m = same & (row_ids != col_ids) & col_ok
    neg_m = (~same) & col_ok
    pos_f = pos_m.astype(jnp.float32)
    neg_f = neg_m.astype(jnp.float32)

    # Online (flash-style) masked logsumexp over the j axis.
    pos_vals = jnp.where(pos_m, dist, NEG_INF)
    neg_vals = jnp.where(neg_m, margin - dist, NEG_INF)

    m_p_new = jnp.maximum(m_pos[...], jnp.max(pos_vals, axis=1, keepdims=True))
    m_n_new = jnp.maximum(m_neg[...], jnp.max(neg_vals, axis=1, keepdims=True))

    p_exp = jnp.exp(pos_vals - m_p_new) * pos_f
    n_exp = jnp.exp(neg_vals - m_n_new) * neg_f

    l_pos[...] = (jnp.exp(m_pos[...] - m_p_new) * l_pos[...]
                  + jnp.sum(p_exp, axis=1, keepdims=True))
    l_neg[...] = (jnp.exp(m_neg[...] - m_n_new) * l_neg[...]
                  + jnp.sum(n_exp, axis=1, keepdims=True))
    m_pos[...] = m_p_new
    m_neg[...] = m_n_new

    @pl.when(j == nj - 1)
    def _finalize():
        pos_lse = m_pos[...] + jnp.log(jnp.maximum(l_pos[...], 1e-30))
        neg_lse = m_neg[...] + jnp.log(jnp.maximum(l_neg[...], 1e-30))
        per_anchor = jnp.maximum(pos_lse + neg_lse, 0.0)     # relu BEFORE masking

        rows = i * blk_i + lax.broadcasted_iota(jnp.int32, (blk_i, 1), 0)
        row_ok = (rows < num_rows).astype(jnp.float32)
        has_pos = (m_pos[...] > 0.5 * NEG_INF).astype(jnp.float32)
        valid = has_pos * row_ok

        loss_ref[...] = per_anchor * valid
        valid_ref[...] = valid
        norm_ref[...] = jnp.sqrt(rsq_i) * row_ok             # reuse |x|^2 for L2 reg


def _block_sizes(bs):
    # <=128 rows: single block on both axes (padded to a sublane multiple).
    # Larger: 128 anchors ("parallel") x 256 candidates ("arbitrary" reduction):
    # MXU-aligned on all generations and a small per-step VMEM footprint
    # (safe under v7x's 32 MiB default scoped VMEM).
    if bs <= 128:
        blk = _round_up(bs, 8)
        return blk, blk, blk
    return 128, 256, _round_up(bs, 256)


@functools.partial(jax.jit, static_argnames=("margin", "l2_weight"))
def lifted_loss(batch, labels, *, margin=1.0, l2_weight=0.005):
    x = jnp.asarray(batch, jnp.float32)
    labels = jnp.asarray(labels, jnp.int32).reshape(-1)
    bs, dim = x.shape

    blk_i, blk_j, bs_pad = _block_sizes(bs)
    pad = bs_pad - bs
    x_p = jnp.pad(x, ((0, pad), (0, 0)))
    lab_p = jnp.pad(labels, (0, pad), constant_values=-1)

    # Row statistics: computed once, reused for Gram distances and the L2 term.
    rsq = jnp.sum(x_p * x_p, axis=1, keepdims=True)          # (bs_pad, 1)
    rsum = jnp.sum(x_p, axis=1, keepdims=True)               # (bs_pad, 1)

    lab_i = lab_p.reshape(bs_pad, 1)
    lab_j = lab_p.reshape(1, bs_pad)
    rsq_j = rsq.reshape(1, bs_pad)
    rsum_j = rsum.reshape(1, bs_pad)

    grid = (bs_pad // blk_i, bs_pad // blk_j)
    kernel = functools.partial(_lifted_kernel, margin=float(margin), num_rows=bs)

    loss_rows, valid_rows, norm_rows = pl.pallas_call(
        kernel,
        out_shape=(
            jax.ShapeDtypeStruct((bs_pad, 1), jnp.float32),
            jax.ShapeDtypeStruct((bs_pad, 1), jnp.float32),
            jax.ShapeDtypeStruct((bs_pad, 1), jnp.float32),
        ),
        grid_spec=pltpu.PrefetchScalarGridSpec(
            num_scalar_prefetch=0,
            grid=grid,
            in_specs=[
                pl.BlockSpec((blk_i, dim), lambda i, j: (i, 0)),   # anchor rows
                pl.BlockSpec((blk_j, dim), lambda i, j: (j, 0)),   # candidate rows
                pl.BlockSpec((blk_i, 1), lambda i, j: (i, 0)),     # labels (col)
                pl.BlockSpec((1, blk_j), lambda i, j: (0, j)),     # labels (row)
                pl.BlockSpec((blk_i, 1), lambda i, j: (i, 0)),     # |x|^2  (col)
                pl.BlockSpec((blk_i, 1), lambda i, j: (i, 0)),     # sum(x) (col)
                pl.BlockSpec((1, blk_j), lambda i, j: (0, j)),     # |x|^2  (row)
                pl.BlockSpec((1, blk_j), lambda i, j: (0, j)),     # sum(x) (row)
            ],
            out_specs=(
                pl.BlockSpec((blk_i, 1), lambda i, j: (i, 0)),
                pl.BlockSpec((blk_i, 1), lambda i, j: (i, 0)),
                pl.BlockSpec((blk_i, 1), lambda i, j: (i, 0)),
            ),
            scratch_shapes=[pltpu.VMEM((blk_i, 1), jnp.float32)] * 4,
        ),
        compiler_params=pltpu.CompilerParams(
            dimension_semantics=("parallel", "arbitrary")),
        cost_estimate=pl.CostEstimate(
            flops=int(2 * bs_pad * bs_pad * dim),
            transcendentals=int(3 * bs_pad * bs_pad),
            bytes_accessed=int(4 * (2 * bs_pad * dim + 9 * bs_pad))),
    )(x_p, x_p, lab_i, lab_j, rsq, rsum, rsq_j, rsum_j)

    n_valid = jnp.maximum(jnp.sum(valid_rows), 1.0)          # guard 0/0
    loss_main = jnp.sum(loss_rows) / n_valid
    loss_l2 = l2_weight * (jnp.sum(norm_rows) / bs)
    return loss_main + loss_l2


def lifted_loss_ref(batch, labels, margin, l2_weight):
    """Pure-numpy f64 reference mirroring the PyTorch forward (sanity check)."""
    batch = np.asarray(batch, np.float64)
    labels = np.asarray(labels).reshape(-1)
    bs = batch.shape[0]

    def lse(v):
        m = v.max()
        return m + np.log(np.exp(v - m).sum())

    losses = []
    for i in range(bs):
        pos = np.where((labels == labels[i]) & (np.arange(bs) != i))[0]
        neg = np.where(labels != labels[i])[0]
        if len(pos) == 0:
            continue
        d_pos = np.sqrt(((batch[i] - batch[pos] + EPS) ** 2).sum(-1))
        d_neg = np.sqrt(((batch[i] - batch[neg] + EPS) ** 2).sum(-1))
        losses.append(max(lse(d_pos) + lse(margin - d_neg), 0.0))
    l2 = np.mean(np.sqrt((batch ** 2).sum(-1)))
    return float(np.mean(losses) + l2_weight * l2)


if __name__ == "__main__":
    key = jax.random.PRNGKey(0)
    BS, DIM = 8, 32
    batch = jax.random.normal(key, (BS, DIM), dtype=jnp.float32)
    labels = np.array([0, 0, 1, 1, 2, 2, 0, 1], dtype=np.int32)
    margin, l2_weight = 1.0, 0.005        # opt.loss_lifted_neg_margin / _l2

    loss = lifted_loss(batch, jnp.asarray(labels), margin=margin, l2_weight=l2_weight)
    loss = jax.block_until_ready(loss)

    ref = lifted_loss_ref(np.asarray(batch), labels, margin, l2_weight)
    assert np.allclose(float(loss), ref, rtol=1e-4, atol=1e-4), (float(loss), ref)
    print("KERNEL_OK")
</pallas_src>

<mosaic_0001>
module attributes {stable_mosaic.version = 11 : i64} {
  func.func @_lifted_kernel(%arg0: i32, %arg1: i32, %arg2: memref<8x32xf32, #tpu.memory_space<vmem>>, %arg3: memref<8x32xf32, #tpu.memory_space<vmem>>, %arg4: memref<8x1xi32, #tpu.memory_space<vmem>>, %arg5: memref<1x8xi32, #tpu.memory_space<vmem>>, %arg6: memref<8x1xf32, #tpu.memory_space<vmem>>, %arg7: memref<8x1xf32, #tpu.memory_space<vmem>>, %arg8: memref<1x8xf32, #tpu.memory_space<vmem>>, %arg9: memref<1x8xf32, #tpu.memory_space<vmem>>, %arg10: memref<8x1xf32, #tpu.memory_space<vmem>>, %arg11: memref<8x1xf32, #tpu.memory_space<vmem>>, %arg12: memref<8x1xf32, #tpu.memory_space<vmem>>, %arg13: memref<8x1xf32, #tpu.memory_space<vmem>>, %arg14: memref<8x1xf32, #tpu.memory_space<vmem>>, %arg15: memref<8x1xf32, #tpu.memory_space<vmem>>, %arg16: memref<8x1xf32, #tpu.memory_space<vmem>>) attributes {dimension_semantics = [#tpu.dimension_semantics<parallel>, #tpu.dimension_semantics<arbitrary>], iteration_bounds = array<i64: 1, 1>, scalar_prefetch = 0 : i64, scratch_operands = 4 : i64, tpu.core_type = #tpu.core_type<tc>, window_params = [{transform_indices = @transform_0, window_bounds = array<i64: 8, 32>}, {transform_indices = @transform_1, window_bounds = array<i64: 8, 32>}, {transform_indices = @transform_2, window_bounds = array<i64: 8, 1>}, {transform_indices = @transform_3, window_bounds = array<i64: 1, 8>}, {transform_indices = @transform_4, window_bounds = array<i64: 8, 1>}, {transform_indices = @transform_5, window_bounds = array<i64: 8, 1>}, {transform_indices = @transform_6, window_bounds = array<i64: 1, 8>}, {transform_indices = @transform_7, window_bounds = array<i64: 1, 8>}, {transform_indices = @transform_8, window_bounds = array<i64: 8, 1>}, {transform_indices = @transform_9, window_bounds = array<i64: 8, 1>}, {transform_indices = @transform_10, window_bounds = array<i64: 8, 1>}]} {
    %c0_i32 = arith.constant 0 : i32
    %0 = arith.cmpi eq, %arg1, %c0_i32 : i32
    %1 = arith.extui %0 : i1 to i32
    %c0_i32_0 = arith.constant 0 : i32
    %2 = arith.cmpi ne, %1, %c0_i32_0 : i32
    scf.if %2 {
      %cst_52 = arith.constant -1.000000e+30 : f32
      %96 = vector.broadcast %cst_52 : f32 to vector<8x1xf32>
      %c0_53 = arith.constant 0 : index
      %c0_54 = arith.constant 0 : index
      %97 = vector.load %arg13[%c0_53, %c0_54] : memref<8x1xf32, #tpu.memory_space<vmem>>, vector<8x1xf32>
      tpu.vector_store %arg13[%c0_53, %c0_54], %96 {strides = array<i32>} : memref<8x1xf32, #tpu.memory_space<vmem>>, vector<8x1xf32>,
      %cst_55 = arith.constant 0.000000e+00 : f32
      %98 = vector.broadcast %cst_55 : f32 to vector<8x1xf32>
      %c0_56 = arith.constant 0 : index
      %c0_57 = arith.constant 0 : index
      %99 = vector.load %arg14[%c0_56, %c0_57] : memref<8x1xf32, #tpu.memory_space<vmem>>, vector<8x1xf32>
      tpu.vector_store %arg14[%c0_56, %c0_57], %98 {strides = array<i32>} : memref<8x1xf32, #tpu.memory_space<vmem>>, vector<8x1xf32>,
      %cst_58 = arith.constant -1.000000e+30 : f32
      %100 = vector.broadcast %cst_58 : f32 to vector<8x1xf32>
      %c0_59 = arith.constant 0 : index
      %c0_60 = arith.constant 0 : index
      %101 = vector.load %arg15[%c0_59, %c0_60] : memref<8x1xf32, #tpu.memory_space<vmem>>, vector<8x1xf32>
      tpu.vector_store %arg15[%c0_59, %c0_60], %100 {strides = array<i32>} : memref<8x1xf32, #tpu.memory_space<vmem>>, vector<8x1xf32>,
      %cst_61 = arith.constant 0.000000e+00 : f32
      %102 = vector.broadcast %cst_61 : f32 to vector<8x1xf32>
      %c0_62 = arith.constant 0 : index
      %c0_63 = arith.constant 0 : index
      %103 = vector.load %arg16[%c0_62, %c0_63] : memref<8x1xf32, #tpu.memory_space<vmem>>, vector<8x1xf32>
      tpu.vector_store %arg16[%c0_62, %c0_63], %102 {strides = array<i32>} : memref<8x1xf32, #tpu.memory_space<vmem>>, vector<8x1xf32>,
    } else {
    }
    %c0 = arith.constant 0 : index
    %c0_1 = arith.constant 0 : index
    %3 = vector.load %arg2[%c0, %c0_1] : memref<8x32xf32, #tpu.memory_space<vmem>>, vector<8x32xf32>
    %c0_2 = arith.constant 0 : index
    %c0_3 = arith.constant 0 : index
    %4 = vector.load %arg3[%c0_2, %c0_3] : memref<8x32xf32, #tpu.memory_space<vmem>>, vector<8x32xf32>
    %c0_4 = arith.constant 0 : index
    %c0_5 = arith.constant 0 : index
    %5 = vector.load %arg6[%c0_4, %c0_5] : memref<8x1xf32, #tpu.memory_space<vmem>>, vector<8x1xf32>
    %c0_6 = arith.constant 0 : index
    %c0_7 = arith.constant 0 : index
    %6 = vector.load %arg7[%c0_6, %c0_7] : memref<8x1xf32, #tpu.memory_space<vmem>>, vector<8x1xf32>
    %c0_8 = arith.constant 0 : index
    %c0_9 = arith.constant 0 : index
    %7 = vector.load %arg8[%c0_8, %c0_9] : memref<1x8xf32, #tpu.memory_space<vmem>>, vector<1x8xf32>
    %c0_10 = arith.constant 0 : index
    %c0_11 = arith.constant 0 : index
    %8 = vector.load %arg9[%c0_10, %c0_11] : memref<1x8xf32, #tpu.memory_space<vmem>>, vector<1x8xf32>
    %cst = arith.constant dense<0.000000e+00> : vector<8x8xf32>
    %9 = tpu.matmul %3, %4, %cst {dimension_numbers = #tpu.dot_dimension_numbers<[1], [1], [0], [0], [0, 0, 1, 0], [], []>} : vector<8x32xf32>, vector<8x32xf32>, vector<8x8xf32> -> vector<8x8xf32>
    %10 = vector.broadcast %5 : vector<8x1xf32> to vector<8x8xf32>
    %11 = vector.broadcast %7 : vector<1x8xf32> to vector<8x8xf32>
    %12 = arith.addf %10, %11 : vector<8x8xf32>
    %cst_12 = arith.constant 2.000000e+00 : f32
    %13 = vector.broadcast %cst_12 : f32 to vector<8x8xf32>
    %14 = arith.mulf %13, %9 : vector<8x8xf32>
    %15 = arith.subf %12, %14 : vector<8x8xf32>
    %16 = vector.broadcast %6 : vector<8x1xf32> to vector<8x8xf32>
    %17 = vector.broadcast %8 : vector<1x8xf32> to vector<8x8xf32>
    %18 = arith.subf %16, %17 : vector<8x8xf32>
    %cst_13 = arith.constant 2.000000e-06 : f32
    %19 = vector.broadcast %cst_13 : f32 to vector<8x8xf32>
    %20 = arith.mulf %19, %18 : vector<8x8xf32>
    %21 = arith.addf %15, %20 : vector<8x8xf32>
    %cst_14 = arith.constant 3.200000e-11 : f32
    %22 = vector.broadcast %cst_14 : f32 to vector<8x8xf32>
    %23 = arith.addf %21, %22 : vector<8x8xf32>
    %cst_15 = arith.constant 0.000000e+00 : f32
    %24 = vector.broadcast %cst_15 : f32 to vector<8x8xf32>
    %25 = arith.maximumf %23, %24 : vector<8x8xf32>
    %26 = math.sqrt %25 : vector<8x8xf32>
    %c0_16 = arith.constant 0 : index
    %c0_17 = arith.constant 0 : index
    %27 = vector.load %arg4[%c0_16, %c0_17] : memref<8x1xi32, #tpu.memory_space<vmem>>, vector<8x1xi32>
    %c0_18 = arith.constant 0 : index
    %c0_19 = arith.constant 0 : index
    %28 = vector.load %arg5[%c0_18, %c0_19] : memref<1x8xi32, #tpu.memory_space<vmem>>, vector<1x8xi32>
    %29 = vector.broadcast %27 : vector<8x1xi32> to vector<8x8xi32>
    %30 = vector.broadcast %28 : vector<1x8xi32> to vector<8x8xi32>
    %31 = arith.cmpi eq, %29, %30 : vector<8x8xi32>
    %c8_i32 = arith.constant 8 : i32
    %32 = arith.muli %arg0, %c8_i32 : i32
    %33 = tpu.iota {dimensions = array<i32: 0>} : vector<8x8xi32>
    %34 = vector.broadcast %32 : i32 to vector<8x8xi32>
    %35 = arith.addi %34, %33 : vector<8x8xi32>
    %c8_i32_20 = arith.constant 8 : i32
    %36 = arith.muli %arg1, %c8_i32_20 : i32
    %37 = tpu.iota {dimensions = array<i32: 1>} : vector<8x8xi32>
    %38 = vector.broadcast %36 : i32 to vector<8x8xi32>
    %39 = arith.addi %38, %37 : vector<8x8xi32>
    %c8_i32_21 = arith.constant 8 : i32
    %40 = vector.broadcast %c8_i32_21 : i32 to vector<8x8xi32>
    %41 = arith.cmpi slt, %39, %40 : vector<8x8xi32>
    %42 = arith.cmpi ne, %35, %39 : vector<8x8xi32>
    %43 = arith.andi %31, %42 : vector<8x8xi1>
    %44 = arith.andi %43, %41 : vector<8x8xi1>
    %cst_22 = arith.constant dense<true> : vector<8x8xi1>
    %45 = arith.xori %31, %cst_22 : vector<8x8xi1>
    %46 = arith.andi %45, %41 : vector<8x8xi1>
    %47 = arith.extui %44 : vector<8x8xi1> to vector<8x8xi32>
    %48 = arith.sitofp %47 : vector<8x8xi32> to vector<8x8xf32>
    %49 = arith.extui %46 : vector<8x8xi1> to vector<8x8xi32>
    %50 = arith.sitofp %49 : vector<8x8xi32> to vector<8x8xf32>
    %cst_23 = arith.constant -1.000000e+30 : f32
    %51 = vector.broadcast %cst_23 : f32 to vector<8x8xf32>
    %52 = arith.select %44, %26, %51 : vector<8x8xi1>, vector<8x8xf32>
    %cst_24 = arith.constant 1.000000e+00 : f32
    %53 = vector.broadcast %cst_24 : f32 to vector<8x8xf32>
    %54 = arith.subf %53, %26 : vector<8x8xf32>
    %cst_25 = arith.constant -1.000000e+30 : f32
    %55 = vector.broadcast %cst_25 : f32 to vector<8x8xf32>
    %56 = arith.select %46, %54, %55 : vector<8x8xi1>, vector<8x8xf32>
    %c0_26 = arith.constant 0 : index
    %c0_27 = arith.constant 0 : index
    %57 = vector.load %arg13[%c0_26, %c0_27] : memref<8x1xf32, #tpu.memory_space<vmem>>, vector<8x1xf32>
    %cst_28 = arith.constant dense<0xFF800000> : vector<8xf32>
    %58 = vector.multi_reduction <maximumf>, %52, %cst_28 [1] : vector<8x8xf32> to vector<8xf32>
    %59 = vector.shape_cast %58 : vector<8xf32> to vector<8x1xf32>
    %60 = arith.maximumf %57, %59 : vector<8x1xf32>
    %c0_29 = arith.constant 0 : index
    %c0_30 = arith.constant 0 : index
    %61 = vector.load %arg15[%c0_29, %c0_30] : memref<8x1xf32, #tpu.memory_space<vmem>>, vector<8x1xf32>
    %cst_31 = arith.constant dense<0xFF800000> : vector<8xf32>
    %62 = vector.multi_reduction <maximumf>, %56, %cst_31 [1] : vector<8x8xf32> to vector<8xf32>
    %63 = vector.shape_cast %62 : vector<8xf32> to vector<8x1xf32>
    %64 = arith.maximumf %61, %63 : vector<8x1xf32>
    %65 = vector.broadcast %60 : vector<8x1xf32> to vector<8x8xf32>
    %66 = arith.subf %52, %65 : vector<8x8xf32>
    %67 = math.exp %66 : vector<8x8xf32>
    %68 = arith.mulf %67, %48 : vector<8x8xf32>
    %69 = vector.broadcast %64 : vector<8x1xf32> to vector<8x8xf32>
    %70 = arith.subf %56, %69 : vector<8x8xf32>
    %71 = math.exp %70 : vector<8x8xf32>
    %72 = arith.mulf %71, %50 : vector<8x8xf32>
    %c0_32 = arith.constant 0 : index
    %c0_33 = arith.constant 0 : index
    %73 = vector.load %arg13[%c0_32, %c0_33] : memref<8x1xf32, #tpu.memory_space<vmem>>, vector<8x1xf32>
    %74 = arith.subf %73, %60 : vector<8x1xf32>
    %75 = math.exp %74 : vector<8x1xf32>
    %c0_34 = arith.constant 0 : index
    %c0_35 = arith.constant 0 : index
    %76 = vector.load %arg14[%c0_34, %c0_35] : memref<8x1xf32, #tpu.memory_space<vmem>>, vector<8x1xf32>
    %77 = arith.mulf %75, %76 : vector<8x1xf32>
    %cst_36 = arith.constant dense<0.000000e+00> : vector<8xf32>
    %78 = vector.multi_reduction <add>, %68, %cst_36 [1] : vector<8x8xf32> to vector<8xf32>
    %79 = vector.shape_cast %78 : vector<8xf32> to vector<8x1xf32>
    %80 = arith.addf %77, %79 : vector<8x1xf32>
    %c0_37 = arith.constant 0 : index
    %c0_38 = arith.constant 0 : index
    %81 = vector.load %arg14[%c0_37, %c0_38] : memref<8x1xf32, #tpu.memory_space<vmem>>, vector<8x1xf32>
    tpu.vector_store %arg14[%c0_37, %c0_38], %80 {strides = array<i32>} : memref<8x1xf32, #tpu.memory_space<vmem>>, vector<8x1xf32>,
    %c0_39 = arith.constant 0 : index
    %c0_40 = arith.constant 0 : index
    %82 = vector.load %arg15[%c0_39, %c0_40] : memref<8x1xf32, #tpu.memory_space<vmem>>, vector<8x1xf32>
    %83 = arith.subf %82, %64 : vector<8x1xf32>
    %84 = math.exp %83 : vector<8x1xf32>
    %c0_41 = arith.constant 0 : index
    %c0_42 = arith.constant 0 : index
    %85 = vector.load %arg16[%c0_41, %c0_42] : memref<8x1xf32, #tpu.memory_space<vmem>>, vector<8x1xf32>
    %86 = arith.mulf %84, %85 : vector<8x1xf32>
    %cst_43 = arith.constant dense<0.000000e+00> : vector<8xf32>
    %87 = vector.multi_reduction <add>, %72, %cst_43 [1] : vector<8x8xf32> to vector<8xf32>
    %88 = vector.shape_cast %87 : vector<8xf32> to vector<8x1xf32>
    %89 = arith.addf %86, %88 : vector<8x1xf32>
    %c0_44 = arith.constant 0 : index
    %c0_45 = arith.constant 0 : index
    %90 = vector.load %arg16[%c0_44, %c0_45] : memref<8x1xf32, #tpu.memory_space<vmem>>, vector<8x1xf32>
    tpu.vector_store %arg16[%c0_44, %c0_45], %89 {strides = array<i32>} : memref<8x1xf32, #tpu.memory_space<vmem>>, vector<8x1xf32>,
    %c0_46 = arith.constant 0 : index
    %c0_47 = arith.constant 0 : index
    %91 = vector.load %arg13[%c0_46, %c0_47] : memref<8x1xf32, #tpu.memory_space<vmem>>, vector<8x1xf32>
    tpu.vector_store %arg13[%c0_46, %c0_47], %60 {strides = array<i32>} : memref<8x1xf32, #tpu.memory_space<vmem>>, vector<8x1xf32>,
    %c0_48 = arith.constant 0 : index
    %c0_49 = arith.constant 0 : index
    %92 = vector.load %arg15[%c0_48, %c0_49] : memref<8x1xf32, #tpu.memory_space<vmem>>, vector<8x1xf32>
    tpu.vector_store %arg15[%c0_48, %c0_49], %64 {strides = array<i32>} : memref<8x1xf32, #tpu.memory_space<vmem>>, vector<8x1xf32>,
    %c0_i32_50 = arith.constant 0 : i32
    %93 = arith.cmpi eq, %arg1, %c0_i32_50 : i32
    %94 = arith.extui %93 : i1 to i32
    %c0_i32_51 = arith.constant 0 : i32
    %95 = arith.cmpi ne, %94, %c0_i32_51 : i32
    scf.if %95 {
      %c0_52 = arith.constant 0 : index
      %c0_53 = arith.constant 0 : index
      %96 = vector.load %arg13[%c0_52, %c0_53] : memref<8x1xf32, #tpu.memory_space<vmem>>, vector<8x1xf32>
      %c0_54 = arith.constant 0 : index
      %c0_55 = arith.constant 0 : index
      %97 = vector.load %arg14[%c0_54, %c0_55] : memref<8x1xf32, #tpu.memory_space<vmem>>, vector<8x1xf32>
      %cst_56 = arith.constant 1.000000e-30 : f32
      %98 = vector.broadcast %cst_56 : f32 to vector<8x1xf32>
      %99 = arith.maximumf %97, %98 : vector<8x1xf32>
      %100 = math.log %99 : vector<8x1xf32>
      %101 = arith.addf %96, %100 : vector<8x1xf32>
      %c0_57 = arith.constant 0 : index
      %c0_58 = arith.constant 0 : index
      %102 = vector.load %arg15[%c0_57, %c0_58] : memref<8x1xf32, #tpu.memory_space<vmem>>, vector<8x1xf32>
      %c0_59 = arith.constant 0 : index
      %c0_60 = arith.constant 0 : index
      %103 = vector.load %arg16[%c0_59, %c0_60] : memref<8x1xf32, #tpu.memory_space<vmem>>, vector<8x1xf32>
      %cst_61 = arith.constant 1.000000e-30 : f32
      %104 = vector.broadcast %cst_61 : f32 to vector<8x1xf32>
      %105 = arith.maximumf %103, %104 : vector<8x1xf32>
      %106 = math.log %105 : vector<8x1xf32>
      %107 = arith.addf %102, %106 : vector<8x1xf32>
      %108 = arith.addf %101, %107 : vector<8x1xf32>
      %cst_62 = arith.constant 0.000000e+00 : f32
      %109 = vector.broadcast %cst_62 : f32 to vector<8x1xf32>
      %110 = arith.maximumf %108, %109 : vector<8x1xf32>
      %c8_i32_63 = arith.constant 8 : i32
      %111 = arith.muli %arg0, %c8_i32_63 : i32
      %112 = tpu.iota {dimensions = array<i32: 0>} : vector<8x1xi32>
      %113 = vector.broadcast %111 : i32 to vector<8x1xi32>
      %114 = arith.addi %113, %112 : vector<8x1xi32>
      %c8_i32_64 = arith.constant 8 : i32
      %115 = vector.broadcast %c8_i32_64 : i32 to vector<8x1xi32>
      %116 = arith.cmpi slt, %114, %115 : vector<8x1xi32>
      %117 = arith.extui %116 : vector<8x1xi1> to vector<8x1xi32>
      %118 = arith.sitofp %117 : vector<8x1xi32> to vector<8x1xf32>
      %c0_65 = arith.constant 0 : index
      %c0_66 = arith.constant 0 : index
      %119 = vector.load %arg13[%c0_65, %c0_66] : memref<8x1xf32, #tpu.memory_space<vmem>>, vector<8x1xf32>
      %cst_67 = arith.constant -5.000000e+29 : f32
      %120 = vector.broadcast %cst_67 : f32 to vector<8x1xf32>
      %121 = arith.cmpf ogt, %119, %120 : vector<8x1xf32>
      %122 = arith.extui %121 : vector<8x1xi1> to vector<8x1xi32>
      %123 = arith.sitofp %122 : vector<8x1xi32> to vector<8x1xf32>
      %124 = arith.mulf %123, %118 : vector<8x1xf32>
      %125 = arith.mulf %110, %124 : vector<8x1xf32>
      %c0_68 = arith.constant 0 : index
      %c0_69 = arith.constant 0 : index
      %126 = vector.load %arg10[%c0_68, %c0_69] : memref<8x1xf32, #tpu.memory_space<vmem>>, vector<8x1xf32>
      tpu.vector_store %arg10[%c0_68, %c0_69], %125 {strides = array<i32>} : memref<8x1xf32, #tpu.memory_space<vmem>>, vector<8x1xf32>,
      %c0_70 = arith.constant 0 : index
      %c0_71 = arith.constant 0 : index
      %127 = vector.load %arg11[%c0_70, %c0_71] : memref<8x1xf32, #tpu.memory_space<vmem>>, vector<8x1xf32>
      tpu.vector_store %arg11[%c0_70, %c0_71], %124 {strides = array<i32>} : memref<8x1xf32, #tpu.memory_space<vmem>>, vector<8x1xf32>,
      %128 = math.sqrt %5 : vector<8x1xf32>
      %129 = arith.mulf %128, %118 : vector<8x1xf32>
      %c0_72 = arith.constant 0 : index
      %c0_73 = arith.constant 0 : index
      %130 = vector.load %arg12[%c0_72, %c0_73] : memref<8x1xf32, #tpu.memory_space<vmem>>, vector<8x1xf32>
      tpu.vector_store %arg12[%c0_72, %c0_73], %129 {strides = array<i32>} : memref<8x1xf32, #tpu.memory_space<vmem>>, vector<8x1xf32>,
    } else {
    }
    return
  }
  func.func @transform_0(%arg0: i32, %arg1: i32) -> (i32, i32) {
    %c0_i32 = arith.constant 0 : i32
    %c0_i32_0 = arith.constant 0 : i32
    return %arg0, %c0_i32 : i32, i32
  }
  func.func @transform_1(%arg0: i32, %arg1: i32) -> (i32, i32) {
    %c0_i32 = arith.constant 0 : i32
    %c0_i32_0 = arith.constant 0 : i32
    return %arg1, %c0_i32 : i32, i32
  }
  func.func @transform_2(%arg0: i32, %arg1: i32) -> (i32, i32) {
    %c0_i32 = arith.constant 0 : i32
    %c0_i32_0 = arith.constant 0 : i32
    return %arg0, %c0_i32 : i32, i32
  }
  func.func @transform_3(%arg0: i32, %arg1: i32) -> (i32, i32) {
    %c0_i32 = arith.constant 0 : i32
    %c0_i32_0 = arith.constant 0 : i32
    return %c0_i32, %arg1 : i32, i32
  }
  func.func @transform_4(%arg0: i32, %arg1: i32) -> (i32, i32) {
    %c0_i32 = arith.constant 0 : i32
    %c0_i32_0 = arith.constant 0 : i32
    return %arg0, %c0_i32 : i32, i32
  }
  func.func @transform_5(%arg0: i32, %arg1: i32) -> (i32, i32) {
    %c0_i32 = arith.constant 0 : i32
    %c0_i32_0 = arith.constant 0 : i32
    return %arg0, %c0_i32 : i32, i32
  }
  func.func @transform_6(%arg0: i32, %arg1: i32) -> (i32, i32) {
    %c0_i32 = arith.constant 0 : i32
    %c0_i32_0 = arith.constant 0 : i32
    return %c0_i32, %arg1 : i32, i32
  }
  func.func @transform_7(%arg0: i32, %arg1: i32) -> (i32, i32) {
    %c0_i32 = arith.constant 0 : i32
    %c0_i32_0 = arith.constant 0 : i32
    return %c0_i32, %arg1 : i32, i32
  }
  func.func @transform_8(%arg0: i32, %arg1: i32) -> (i32, i32) {
    %c0_i32 = arith.constant 0 : i32
    %c0_i32_0 = arith.constant 0 : i32
    return %arg0, %c0_i32 : i32, i32
  }
  func.func @transform_9(%arg0: i32, %arg1: i32) -> (i32, i32) {
    %c0_i32 = arith.constant 0 : i32
    %c0_i32_0 = arith.constant 0 : i32
    return %arg0, %c0_i32 : i32, i32
  }
  func.func @transform_10(%arg0: i32, %arg1: i32) -> (i32, i32) {
    %c0_i32 = arith.constant 0 : i32
    %c0_i32_0 = arith.constant 0 : i32
    return %arg0, %c0_i32 : i32, i32
  }
}

</mosaic_0001>

<llo_original>
// kernel: lifted_loss.1
$region0: #{lifted_loss.1}
  #allocation0 [shape = 'u32[]', space=smem, size = 0x4, offset = 0x4, fixed_abs, tag = 'smem constant byte address 0x4 - core index']
  #allocation1 [shape = 'u32[144,128]{1,0:T(1,128)}', space=vmem, size = 0x12000, scoped, tag = 'internal scratch']
  #allocation2 [shape = 'f32[8,1]{1,0:T(8,128)}', space=vmem, size = 0x1000, scoped, tag = 'scratch operand']
  #allocation3 [shape = 'f32[8,1]{1,0:T(8,128)}', space=vmem, size = 0x1000, scoped, tag = 'scratch operand']
  #allocation4 [shape = 'f32[8,1]{1,0:T(8,128)}', space=vmem, size = 0x1000, scoped, tag = 'scratch operand']
  #allocation5 [shape = 'f32[8,1]{1,0:T(8,128)}', space=vmem, size = 0x1000, scoped, tag = 'scratch operand']
  %s0 = inlined_call_operand.vmem [shape: f32[8,32], index: 0, kind: input, shape index: {}, may-alias: {0,1}]
  %s1 = inlined_call_operand.vmem [shape: f32[8,32], index: 1, kind: input, shape index: {}, may-alias: {0,1}]
  %s2 = inlined_call_operand.vmem [shape: s32[8,1], index: 2, kind: input, shape index: {}]
  %s3 = inlined_call_operand.vmem [shape: s32[1,8], index: 3, kind: input, shape index: {}]
  %s4 = inlined_call_operand.vmem [shape: f32[8,1], index: 4, kind: input, shape index: {}]
  %s5 = inlined_call_operand.vmem [shape: f32[8,1], index: 5, kind: input, shape index: {}]
  %s6 = inlined_call_operand.vmem [shape: f32[1,8], index: 6, kind: input, shape index: {}]
  %s7 = inlined_call_operand.vmem [shape: f32[1,8], index: 7, kind: input, shape index: {}]
  %s8 = inlined_call_operand.vmem [shape: f32[8,1], index: 8, kind: output, shape index: {0}]
  %s9 = inlined_call_operand.vmem [shape: f32[8,1], index: 9, kind: output, shape index: {1}]
  %s10 = inlined_call_operand.vmem [shape: f32[8,1], index: 10, kind: output, shape index: {2}]
  %11 = xla_tuple %s8, %s9, %s10
  %s12 = sld [smem:[#allocation0]]
  $region66: #{lifted_loss.1} parent=0
    _
  %s14 = ssub.s32 1, %s12
  %s15 = scalar_select 0, %s14, %s12
  // Predicated region
  $region2: #{lifted_loss.1} parent=0 // pred_check
    _
  $region3: #{lifted_loss.1} parent=0 // pred_check_branch
    %17 = sbr.rel (0) target = $region5
  $region4: #{lifted_loss.1} parent=0 // pred_region
    _
  $region5: #{lifted_loss.1} parent=0 // pred_fallthru
    _
  // Predicated region
  $region6: #{lifted_loss.1} parent=0 // pred_check
    _
  $region7: #{lifted_loss.1} parent=0 // pred_check_branch
    %19 = sbr.rel (0) target = $region9
  $region8: #{lifted_loss.1} parent=0 // pred_region
    _
  $region9: #{lifted_loss.1} parent=0 // pred_fallthru
    _
  // Predicated region
  $region10: #{lifted_loss.1} parent=0 // pred_check
    _
  $region11: #{lifted_loss.1} parent=0 // pred_check_branch
    %21 = sbr.rel (0) target = $region13
  $region12: #{lifted_loss.1} parent=0 // pred_region
    _
  $region13: #{lifted_loss.1} parent=0 // pred_fallthru
    _
  // Predicated region
  $region14: #{lifted_loss.1} parent=0 // pred_check
    _
  $region15: #{lifted_loss.1} parent=0 // pred_check_branch
    %23 = sbr.rel (0) target = $region17
  $region16: #{lifted_loss.1} parent=0 // pred_region
    _
  $region17: #{lifted_loss.1} parent=0 // pred_fallthru
    _
  // Predicated region
  $region18: #{lifted_loss.1} parent=0 // pred_check
    _
  $region19: #{lifted_loss.1} parent=0 // pred_check_branch
    %25 = sbr.rel (0) target = $region21
  $region20: #{lifted_loss.1} parent=0 // pred_region
    _
  $region21: #{lifted_loss.1} parent=0 // pred_fallthru
    _
  // Predicated region
  $region22: #{lifted_loss.1} parent=0 // pred_check
    _
  $region23: #{lifted_loss.1} parent=0 // pred_check_branch
    %27 = sbr.rel (0) target = $region25
  $region24: #{lifted_loss.1} parent=0 // pred_region
    _
  $region25: #{lifted_loss.1} parent=0 // pred_fallthru
    _
  // Predicated region
  $region26: #{lifted_loss.1} parent=0 // pred_check
    _
  $region27: #{lifted_loss.1} parent=0 // pred_check_branch
    %29 = sbr.rel (0) target = $region29
  $region28: #{lifted_loss.1} parent=0 // pred_region
    _
  $region29: #{lifted_loss.1} parent=0 // pred_fallthru
    _
  // Predicated region
  $region30: #{lifted_loss.1} parent=0 // pred_check
    _
  $region31: #{lifted_loss.1} parent=0 // pred_check_branch
    %31 = sbr.rel (0) target = $region33
  $region32: #{lifted_loss.1} parent=0 // pred_region
    _
  $region33: #{lifted_loss.1} parent=0 // pred_fallthru
    _
  %p32 = scmp.eq.s32.totalorder 0, 0
  // Predicated region
  $region34: #{lifted_loss.1} parent=0 // pred_check
    %p33 = pneg %p32
  $region35: #{lifted_loss.1} parent=0 // pred_check_branch
    %35 = sbr.rel (%p33) target = $region37
  $region36: #{lifted_loss.1} parent=0 // pred_region
    %vm36 = vcmask 7168
    %37 = vst.msk [vmem:[#allocation2] sm:$0xff] %vm36, -1e+30
    %38 = vst.msk [vmem:[#allocation3] sm:$0xff] %vm36, 0.0
    %39 = vst.msk [vmem:[#allocation4] sm:$0xff] %vm36, -1e+30
    %40 = vst.msk [vmem:[#allocation5] sm:$0xff] %vm36, 0.0
  $region37: #{lifted_loss.1} parent=0 // pred_fallthru
    _
  %v41 = vld [vmem:[%s0] sm:$0xff]
  %v42 = vld [vmem:[%s1] sm:$0xff]
  %v43 = vld [vmem:[%s4] sm:$0xff]
  %v44 = vld [vmem:[%s5] sm:$0xff]
  %v45 = vld [vmem:[%s6] sm:$0x1]
  %v46 = vld [vmem:[%s7] sm:$0x1]
  %vm47 = vcmask 261120
  %v49 = vsel %vm47, %v41, 0
  %v52 = vsel %vm47, %v42, 0
  %54 = vmatprep.subr.mxu0 0.0
  %55 = vmatpush1.xpose.msra.mxu0 %v52
  %56 = vmatprep.subr.mxu0 0.0
  %57 = vmatpush1.xpose.msra.mxu0 0.0
  %58 = vmatprep.subr.mxu0 0.0
  %59 = vmatpush1.xpose.msra.mxu0 0.0
  %60 = vmatprep.subr.mxu0 0.0
  %61 = vmatpush1.xpose.msra.mxu0 0.0
  %62 = vmatprep.subr.mxu0 0.0
  %63 = vmatpush1.xpose.msra.mxu0 0.0
  %64 = vmatprep.subr.mxu0 0.0
  %65 = vmatpush1.xpose.msra.mxu0 0.0
  %66 = vmatprep.subr.mxu0 0.0
  %67 = vmatpush1.xpose.msra.mxu0 0.0
  %68 = vmatprep.subr.mxu0 0.0
  %69 = vmatpush1.xpose.msra.mxu0 0.0
  %70 = vmatprep.subr.mxu0 0.0
  %71 = vmatpush1.xpose.msra.mxu0 0.0
  %72 = vmatprep.subr.mxu0 0.0
  %73 = vmatpush1.xpose.msra.mxu0 0.0
  %74 = vmatprep.subr.mxu0 0.0
  %75 = vmatpush1.xpose.msra.mxu0 0.0
  %76 = vmatprep.subr.mxu0 0.0
  %77 = vmatpush1.xpose.msra.mxu0 0.0
  %78 = vmatprep.subr.mxu0 0.0
  %79 = vmatpush1.xpose.msra.mxu0 0.0
  %80 = vmatprep.subr.mxu0 0.0
  %81 = vmatpush1.xpose.msra.mxu0 0.0
  %82 = vmatprep.subr.mxu0 0.0
  %83 = vmatpush1.xpose.msra.mxu0 0.0
  %84 = vmatprep.subr.mxu0 0.0
  %85 = vmatpush1.xpose.msra.mxu0 0.0
  %86 = vmatprep.subr.mxu0 0.0
  %87 = vmatpush1.xpose.msra.mxu0 0.0
  %88 = vmatprep.subr.mxu0 0.0
  %89 = vmatpush1.xpose.msra.mxu0 0.0
  %90 = vmatprep.subr.mxu0 0.0
  %91 = vmatpush1.xpose.msra.mxu0 0.0
  %92 = vmatprep.subr.mxu0 0.0
  %93 = vmatpush1.xpose.msra.mxu0 0.0
  %94 = vmatprep.subr.mxu0 0.0
  %95 = vmatpush1.xpose.msra.mxu0 0.0
  %96 = vmatprep.subr.mxu0 0.0
  %97 = vmatpush1.xpose.msra.mxu0 0.0
  %98 = vmatprep.subr.mxu0 0.0
  %99 = vmatpush1.xpose.msra.mxu0 0.0
  %100 = vmatprep.subr.mxu0 0.0
  %101 = vmatpush1.xpose.msra.mxu0 0.0
  %102 = vmatprep.subr.mxu0 0.0
  %103 = vmatpush1.xpose.msra.mxu0 0.0
  %104 = vmatprep.subr.mxu0 0.0
  %105 = vmatpush1.xpose.msra.mxu0 0.0
  %106 = vmatprep.subr.mxu0 0.0
  %107 = vmatpush1.xpose.msra.mxu0 0.0
  %108 = vmatprep.subr.mxu0 0.0
  %109 = vmatpush1.xpose.msra.mxu0 0.0
  %110 = vmatprep.subr.mxu0 0.0
  %111 = vmatpush1.xpose.msra.mxu0 0.0
  %112 = vmatprep.subr.mxu0 0.0
  %113 = vmatpush1.xpose.msra.mxu0 0.0
  %114 = vmatprep.subr.mxu0 0.0
  %115 = vmatpush1.xpose.msra.mxu0 0.0
  %116 = vmatprep.subr.mxu0 0.0
  %117 = vmatpush1.xpose.msra.mxu0 0.0
  %118 = vmatprep.mubr.f32.mxu0 0.0
  %119 = vmatmul.mubr.f32.gmra.mrb[0].mxu0 %v49
  %v120 = vpop.f32.mrb[0].mxu0
  %v121 = vadd.f32 0.0, %v120
  %v122 = vpop.f32.mrb[0].mxu0
  %123 = vdwg.mxu0
  %125 = vset.pattern.permute.xlu0 0
  %126 = vperm.xlu0 %125, %v43
  %v127 = vpop.permute.xlu0 %126
  %v130 = vlaneseq
  %v131 = vshrl.u32 %v130, 7
  %v132 = vsub.s32 0, %v131
  %v133 = vrot.slane %v45, %v132
  %v135 = vadd.f32 %v127, %v133
  %v136 = vmul.f32 %v121, 2.0
  %v137 = vsub.f32 %v135, %v136
  %139 = vset.pattern.permute.xlu0 0
  %140 = vperm.xlu0 %139, %v44
  %v141 = vpop.permute.xlu0 %140
  %v144 = vlaneseq
  %v145 = vshrl.u32 %v144, 7
  %v146 = vsub.s32 0, %v145
  %v147 = vrot.slane %v46, %v146
  %v149 = vsub.f32 %v141, %v147
  %v150 = vmul.f32 %v149, 2e-06
  %v151 = vadd.f32 %v137, %v150
  %v152 = vadd.f32 %v151, 3.2e-11
  %v153 = vmax.f32 %v152, 0.0
  %v154 = vrsqrt.pop %v153
  %v155 = vmul.f32 %v153, %v154
  %vm156 = vcmp.eq.f32.partialorder %v153, inf
  %v157 = vsel %vm156, %v153, %v155
  %vm158 = vcmp.eq.f32.partialorder %v153, 0.0
  %v159 = vand.u32 %v153, 2147483648
  %v160 = vsel %vm158, %v159, %v157
  %v161 = vld [vmem:[%s2] sm:$0xff]
  %v162 = vld [vmem:[%s3] sm:$0x1]
  %163 = vset.pattern.permute.xlu0 0
  %164 = vperm.xlu0 %163, %v161
  %v165 = vpop.permute.xlu0 %164
  %v166 = vlaneseq
  %v167 = vshrl.u32 %v166, 7
  %v168 = vsub.s32 0, %v167
  %v169 = vrot.slane %v162, %v168
  %vm170 = vcmp.eq.s32.totalorder %v165, %v169
  %s171 = smul.u32 0, 8
  %v172 = vlaneseq
  %v173 = vshrl.u32 %v172, 7
  %v174 = vstv %s171
  %v175 = vadd.s32 %v174, %v173
  %s176 = smul.u32 0, 8
  %v177 = vlaneseq
  %v178 = vand.u32 %v177, 127
  %v179 = vstv %s176
  %v180 = vadd.s32 %v179, %v178
  %vm181 = vcmp.lt.s32.totalorder %v180, 8
  %vm182 = vcmp.ne.s32.totalorder %v175, %v180
  %vm183 = vmand %vm170, %vm182
  %vm184 = vmand %vm183, %vm181
  %vm185 = vmxor %vm170, 1
  %vm186 = vmand %vm185, %vm181
  %v187 = vsel %vm184, 1, 0
  %v188 = vcvt.s32.f32 %v187
  %v189 = vsel %vm186, 1, 0
  %v190 = vcvt.s32.f32 %v189
  %v191 = vsel %vm184, %v160, -1e+30
  %v192 = vsub.f32 1.0, %v160
  %v193 = vsel %vm186, %v192, -1e+30
  %v194 = vld [vmem:[#allocation2] sm:$0xff]
  %vm195 = vcmask 64512
  %v196 = vsel %vm195, %v191, -inf
  %197 = vmax.xlane.f32.xlu0 %v196
  %v198 = vpop.xlane.xlu0 %197
  %v199 = vmax.f32 %v194, %v198
  %v200 = vld [vmem:[#allocation4] sm:$0xff]
  %v201 = vsel %vm195, %v193, -inf
  %202 = vmax.xlane.f32.xlu0 %v201
  %v203 = vpop.xlane.xlu0 %202
  %v204 = vmax.f32 %v200, %v203
  %206 = vset.pattern.permute.xlu0 0
  %207 = vperm.xlu0 %206, %v199
  %v208 = vpop.permute.xlu0 %207
  %v210 = vsub.f32 %v191, %v208
  %v211 = vmul.f32 %v210, 1.442695
  %v212 = vpow.pop %v211
  %v213 = vmul.f32 %v212, %v188
  %215 = vset.pattern.permute.xlu0 0
  %216 = vperm.xlu0 %215, %v204
  %v217 = vpop.permute.xlu0 %216
  %v219 = vsub.f32 %v193, %v217
  %v220 = vmul.f32 %v219, 1.442695
  %v221 = vpow.pop %v220
  %v222 = vmul.f32 %v221, %v190
  %v223 = vsub.f32 %v194, %v199
  %v224 = vmul.f32 %v223, 1.442695
  %v225 = vpow.pop %v224
  %v226 = vld [vmem:[#allocation3] sm:$0xff]
  %v227 = vmul.f32 %v225, %v226
  %v228 = vsel %vm195, %v213, 0.0
  %229 = vadd.xlane.f32.xlu0 %v228
  %v230 = vpop.xlane.xlu0 %229
  %v231 = vadd.f32 %v227, %v230
  %vm232 = vcmask 7168
  %233 = vst.msk [vmem:[#allocation3] sm:$0xff] %vm232, %v231
  %v234 = vld [vmem:[#allocation4] sm:$0xff]
  %v235 = vsub.f32 %v234, %v204
  %v236 = vmul.f32 %v235, 1.442695
  %v237 = vpow.pop %v236
  %v238 = vld [vmem:[#allocation5] sm:$0xff]
  %v239 = vmul.f32 %v237, %v238
  %v240 = vsel %vm195, %v222, 0.0
  %241 = vadd.xlane.f32.xlu0 %v240
  %v242 = vpop.xlane.xlu0 %241
  %v243 = vadd.f32 %v239, %v242
  %244 = vst.msk [vmem:[#allocation5] sm:$0xff] %vm232, %v243
  %245 = vst.msk [vmem:[#allocation2] sm:$0xff] %vm232, %v199
  %246 = vst.msk [vmem:[#allocation4] sm:$0xff] %vm232, %v204
  // Predicated region
  $region38: #{lifted_loss.1} parent=0 // pred_check
    %p247 = pneg %p32
  $region39: #{lifted_loss.1} parent=0 // pred_check_branch
    %249 = sbr.rel (%p247) target = $region41
  $region40: #{lifted_loss.1} parent=0 // pred_region
    %v250 = vld [vmem:[#allocation2] sm:$0xff]
    %v251 = vld [vmem:[#allocation3] sm:$0xff]
    %v252 = vmax.f32 %v251, 1e-30
    %v253 = vlog2.pop %v252
    %v254 = vmul.f32 %v253, 0.6931472
    %v255 = vadd.f32 %v250, %v254
    %v256 = vld [vmem:[#allocation4] sm:$0xff]
    %v257 = vld [vmem:[#allocation5] sm:$0xff]
    %v258 = vmax.f32 %v257, 1e-30
    %v259 = vlog2.pop %v258
    %v260 = vmul.f32 %v259, 0.6931472
    %v261 = vadd.f32 %v256, %v260
    %v262 = vadd.f32 %v255, %v261
    %v263 = vmax.f32 %v262, 0.0
    %vm264 = vcmp.lt.s32.totalorder %v175, 8
    %v265 = vsel %vm264, 1, 0
    %v266 = vcvt.s32.f32 %v265
    %vm267 = vcmp.gt.f32.partialorder %v250, -5e+29
    %v268 = vsel %vm267, 1, 0
    %v269 = vcvt.s32.f32 %v268
    %v270 = vmul.f32 %v269, %v266
    %v271 = vmul.f32 %v263, %v270
    %272 = vst.msk [vmem:[%s8] sm:$0xff] %vm232, %v271
    %273 = vst.msk [vmem:[%s9] sm:$0xff] %vm232, %v270
    %v274 = vrsqrt.pop %v43
    %v275 = vmul.f32 %v43, %v274
    %vm276 = vcmp.eq.f32.partialorder %v43, inf
    %v277 = vsel %vm276, %v43, %v275
    %vm278 = vcmp.eq.f32.partialorder %v43, 0.0
    %v279 = vand.u32 %v43, 2147483648
    %v280 = vsel %vm278, %v279, %v277
    %v281 = vmul.f32 %v280, %v266
    %282 = vst.msk [vmem:[%s10] sm:$0xff] %vm232, %v281
  $region41: #{lifted_loss.1} parent=0 // pred_fallthru
    _
  // Predicated region
  $region42: #{lifted_loss.1} parent=0 // pred_check
    _
  $region43: #{lifted_loss.1} parent=0 // pred_check_branch
    %284 = sbr.rel (0) target = $region45
  $region44: #{lifted_loss.1} parent=0 // pred_region
    _
  $region45: #{lifted_loss.1} parent=0 // pred_fallthru
    _
  // Predicated region
  $region46: #{lifted_loss.1} parent=0 // pred_check
    _
  $region47: #{lifted_loss.1} parent=0 // pred_check_branch
    %286 = sbr.rel (0) target = $region49
  $region48: #{lifted_loss.1} parent=0 // pred_region
    _
  $region49: #{lifted_loss.1} parent=0 // pred_fallthru
    _
  // Predicated region
  $region50: #{lifted_loss.1} parent=0 // pred_check
    _
  $region51: #{lifted_loss.1} parent=0 // pred_check_branch
    %288 = sbr.rel (0) target = $region53
  $region52: #{lifted_loss.1} parent=0 // pred_region
    _
  $region53: #{lifted_loss.1} parent=0 // pred_fallthru
    _
  // Predicated region
  $region54: #{lifted_loss.1} parent=0 // pred_check
    _
  $region55: #{lifted_loss.1} parent=0 // pred_check_branch
    %290 = sbr.rel (0) target = $region57
  $region56: #{lifted_loss.1} parent=0 // pred_region
    _
  $region57: #{lifted_loss.1} parent=0 // pred_fallthru
    _
  // Predicated region
  $region58: #{lifted_loss.1} parent=0 // pred_check
    _
  $region59: #{lifted_loss.1} parent=0 // pred_check_branch
    %292 = sbr.rel (0) target = $region61
  $region60: #{lifted_loss.1} parent=0 // pred_region
    _
  $region61: #{lifted_loss.1} parent=0 // pred_fallthru
    _
  // Predicated region
  $region62: #{lifted_loss.1} parent=0 // pred_check
    _
  $region63: #{lifted_loss.1} parent=0 // pred_check_branch
    %294 = sbr.rel (0) target = $region65
  $region64: #{lifted_loss.1} parent=0 // pred_region
    _
  $region65: #{lifted_loss.1} parent=0 // pred_fallthru
    _

</llo_original>
